<compile_context>
chip_gen: v6e
topology: v6e:2x2x1
jax: 0.10.0
libtpu: 0.0.40
codegen_flags: <defaults>
</compile_context>

<pallas_src>
import functools
import math

import jax
import jax.numpy as jnp
from jax.experimental import pallas as pl
from jax.experimental.pallas import tpu as pltpu


def _round_up(x, m):
    return (x + m - 1) // m * m


# -------------------- fused single-pass kernel (primary path) --------------------
def _mca_fused_kernel(xc_ref, vus_ref, wct_ref, wut_ref, o_ref, *, factor, inv_hw):
    # xc_ref : (Bt, Cc, HWp)  native dtype (HWp is a multiple of 128)
    # vus_ref: (Bt, 1, Cu)    f32  -- precomputed GAP of x_us
    # wct_ref: (Cc, Cc)       f32  == W_ceus^T   (so v @ wct == v @ W^T)
    # wut_ref: (Cu, Cc)       f32  == W_us^T
    # o_ref  : (Bt, Cc, HWp)  native dtype
    xc = xc_ref[...].astype(jnp.float32)                               # (Bt, Cc, HWp)

    # Global average pool: lane-axis reduce -> lane-major pooled vector.
    vc = jnp.sum(xc, axis=-1) * inv_hw                                 # (Bt, Cc)
    vu = vus_ref[...][:, 0, :]                                         # (Bt, Cu)

    # Linear (no bias) as MXU matmuls against pre-transposed weights.
    vc2 = jnp.dot(vc, wct_ref[...], preferred_element_type=jnp.float32)  # (Bt, Cc)
    vu2 = jnp.dot(vu, wut_ref[...], preferred_element_type=jnp.float32)  # (Bt, Cc)

    # Channel softmax over the lane axis.
    logits = vc2 * vu2 * factor
    m = jnp.max(logits, axis=-1, keepdims=True)
    e = jnp.exp(logits - m)
    w = e / jnp.sum(e, axis=-1, keepdims=True)                         # (Bt, Cc)

    # y = weight * x + x == (weight + 1) * x, broadcast over the lane (HW) axis.
    o_ref[...] = (xc * (w[:, :, None] + 1.0)).astype(o_ref.dtype)


# ------------------ lane-dense scale kernel (large-H*W fallback) -----------------
def _mca_scale_kernel(xc_ref, w_ref, o_ref):
    # xc_ref: (1, Cc, HWt)  native dtype; w_ref: (1, Cc, 1) f32; o_ref like xc_ref
    xc = xc_ref[...].astype(jnp.float32)
    o_ref[...] = (xc * (w_ref[...] + 1.0)).astype(o_ref.dtype)


def modality_channel_attention_forward(x_ceus, x_us, w_ceus, w_us, factor,
                                       *, max_block_bytes=4 * 1024 * 1024):
    """x_ceus: (B, Cc, H, W), x_us: (B, Cu, H, W) -> (y_ceus, y_us)."""
    B, Cc, H, W = x_ceus.shape
    Cu = x_us.shape[1]
    HW = H * W
    HWp = _round_up(HW, 128)            # keep output stores lane-dense
    out_dtype = x_ceus.dtype
    itemsize = jnp.dtype(out_dtype).itemsize
    factor = float(factor)
    inv_hw = 1.0 / float(HW)

    xc = x_ceus.reshape(B, Cc, HW)      # contiguous reshape (free); native dtype
    if HWp != HW:
        # Zero pad: zeros don't change the GAP sum (we divide by the true HW)
        # and the padded columns are sliced off after the kernel.
        xc = jnp.pad(xc, ((0, 0), (0, 0), (0, HWp - HW)))

    # x_us path: GAP as a fused XLA reduce (x_us is read once from HBM either
    # way); only the tiny pooled vector enters the Pallas kernel.
    v_us = jnp.mean(x_us.astype(jnp.float32), axis=(2, 3))             # (B, Cu) f32

    per_batch_bytes = Cc * HWp * itemsize

    if per_batch_bytes <= max_block_bytes:
        # ---------------- primary path: single fused kernel ----------------
        bt = max(1, min(B, max_block_bytes // per_batch_bytes))
        bt = min(bt, max(1, (B + 1) // 2))   # >= 2 grid steps -> both v7x TCs busy
        while B % bt:                        # exact tiling of the batch axis
            bt -= 1
        block_bytes = bt * per_batch_bytes
        vmem_limit = int(min(48 << 20, max(16 << 20, 8 * block_bytes + (4 << 20))))

        wct = w_ceus.astype(jnp.float32).T   # (Cc, Cc): v @ wct == v @ W_ceus^T
        wut = w_us.astype(jnp.float32).T     # (Cu, Cc)
        kernel = functools.partial(_mca_fused_kernel, factor=factor, inv_hw=inv_hw)

        y = pl.pallas_call(
            kernel,
            out_shape=jax.ShapeDtypeStruct((B, Cc, HWp), out_dtype),
            grid_spec=pltpu.PrefetchScalarGridSpec(
                num_scalar_prefetch=0,
                grid=(B // bt,),
                in_specs=[
                    pl.BlockSpec((bt, Cc, HWp), lambda b: (b, 0, 0)),
                    pl.BlockSpec((bt, 1, Cu), lambda b: (b, 0, 0)),
                    pl.BlockSpec((Cc, Cc), lambda b: (0, 0)),   # constant, not re-DMA'd
                    pl.BlockSpec((Cu, Cc), lambda b: (0, 0)),
                ],
                out_specs=pl.BlockSpec((bt, Cc, HWp), lambda b: (b, 0, 0)),
            ),
            compiler_params=pltpu.CompilerParams(
                dimension_semantics=("parallel",),
                vmem_limit_bytes=vmem_limit),
        )(xc, v_us.reshape(B, 1, Cu), wct, wut)
    else:
        # -------- large-H*W fallback: bounded VMEM (e.g. v7x's 64 MiB) --------
        # The channel weight needs the full GAP before any scaling, and one
        # batch element no longer fits VMEM, so x_ceus is read twice: once by a
        # fused XLA reduce (+ tiny f32 linear/softmax), then once by a
        # lane-dense Pallas scale pass tiled over (batch, HW).
        v_ceus = jnp.mean(x_ceus.astype(jnp.float32), axis=(2, 3))      # (B, Cc)
        logits = (v_ceus @ w_ceus.astype(jnp.float32).T) \
                 * (v_us @ w_us.astype(jnp.float32).T) * factor
        weight = jax.nn.softmax(logits, axis=-1).reshape(B, Cc, 1)      # (B, Cc, 1) f32

        # Largest HW tile (multiple of 128, dividing HWp) within the budget.
        m = HWp // 128
        d = m
        while d > 1 and (m % d or Cc * 128 * d * itemsize > max_block_bytes):
            d -= 1
        hw_t = 128 * d
        block_bytes = Cc * hw_t * itemsize
        vmem_limit = int(min(48 << 20, max(16 << 20, 8 * block_bytes + (4 << 20))))

        y = pl.pallas_call(
            _mca_scale_kernel,
            out_shape=jax.ShapeDtypeStruct((B, Cc, HWp), out_dtype),
            grid_spec=pltpu.PrefetchScalarGridSpec(
                num_scalar_prefetch=0,
                grid=(B, HWp // hw_t),
                in_specs=[
                    pl.BlockSpec((1, Cc, hw_t), lambda b, h: (b, 0, h)),
                    pl.BlockSpec((1, Cc, 1), lambda b, h: (b, 0, 0)),
                ],
                out_specs=pl.BlockSpec((1, Cc, hw_t), lambda b, h: (b, 0, h)),
            ),
            compiler_params=pltpu.CompilerParams(
                dimension_semantics=("parallel", "parallel"),
                vmem_limit_bytes=vmem_limit),
        )(xc, weight)

    if HWp != HW:
        y = y[:, :, :HW]
    y_ceus = y.reshape(B, Cc, H, W)
    y_us = x_us                           # module returns x_us unchanged; no HBM copy
    return y_ceus, y_us


def ref_forward(x_ceus, x_us, w_ceus, w_us, factor):
    """Pure-JAX reference for correctness checking."""
    v_ceus = jnp.mean(x_ceus, axis=(2, 3))                 # (B, Cc)
    v_us = jnp.mean(x_us, axis=(2, 3))                     # (B, Cu)
    v_ceus = v_ceus @ w_ceus.T
    v_us = v_us @ w_us.T
    weight = jax.nn.softmax(v_ceus * v_us * factor, axis=-1)
    y_ceus = weight[:, :, None, None] * x_ceus + x_ceus
    return y_ceus, x_us


if __name__ == "__main__":
    B, C_ceus, C_us, H, W = 2, 64, 64, 16, 16

    key = jax.random.PRNGKey(0)
    k1, k2, k3, k4 = jax.random.split(key, 4)
    x_ceus = jax.random.normal(k1, (B, C_ceus, H, W), jnp.float32)   # NCHW
    x_us = jax.random.normal(k2, (B, C_us, H, W), jnp.float32)       # NCHW
    w_ceus = 0.1 * jax.random.normal(k3, (C_ceus, C_ceus), jnp.float32)   # [out, in]
    w_us = 0.1 * jax.random.normal(k4, (C_ceus, C_us), jnp.float32)       # [out, in]

    # Exact replication of the PyTorch factor expression:
    #   torch.sqrt(torch.tensor(1 / (ceus_channels + us_channels) // 4))
    # ('/' then '//' left-to-right => sqrt(0.0) == 0.0 for these channel counts).
    factor = math.sqrt((1.0 / (C_ceus + C_us)) // 4)

    # 1) Module's own (degenerate) factor, fused path.
    y_ceus, y_us = modality_channel_attention_forward(x_ceus, x_us, w_ceus, w_us, factor)
    y_ceus = jax.block_until_ready(y_ceus)
    ref_ceus, ref_us = ref_forward(x_ceus, x_us, w_ceus, w_us, factor)
    assert y_ceus.shape == (B, C_ceus, H, W), y_ceus.shape
    assert y_us.shape == (B, C_us, H, W), y_us.shape
    assert jnp.allclose(y_ceus, ref_ceus, atol=1e-3, rtol=1e-3), \
        float(jnp.max(jnp.abs(y_ceus - ref_ceus)))
    assert jnp.allclose(y_us, ref_us), "y_us must be an identity passthrough"
    assert y_ceus.dtype == x_ceus.dtype

    # 2) Non-degenerate factor so the linear/softmax path is exercised (fused path).
    y2, _ = modality_channel_attention_forward(x_ceus, x_us, w_ceus, w_us, 1.0)
    y2 = jax.block_until_ready(y2)
    r2, _ = ref_forward(x_ceus, x_us, w_ceus, w_us, 1.0)
    assert jnp.allclose(y2, r2, atol=1e-3, rtol=1e-3), float(jnp.max(jnp.abs(y2 - r2)))

    # 3) Force the large-H*W two-pass fallback (tiny block budget) and check it.
    y3, _ = modality_channel_attention_forward(x_ceus, x_us, w_ceus, w_us, 1.0,
                                               max_block_bytes=1024)
    y3 = jax.block_until_ready(y3)
    assert jnp.allclose(y3, r2, atol=1e-3, rtol=1e-3), float(jnp.max(jnp.abs(y3 - r2)))

    # 4) Non-128-aligned spatial size (10x10 = 100 -> padded to 128 lanes).
    k5, k6 = jax.random.split(k1, 2)
    xa = jax.random.normal(k5, (B, C_ceus, 10, 10), jnp.float32)
    xb = jax.random.normal(k6, (B, C_us, 10, 10), jnp.float32)
    y4, _ = modality_channel_attention_forward(xa, xb, w_ceus, w_us, 1.0)
    y4 = jax.block_until_ready(y4)
    r4, _ = ref_forward(xa, xb, w_ceus, w_us, 1.0)
    assert jnp.allclose(y4, r4, atol=1e-3, rtol=1e-3), float(jnp.max(jnp.abs(y4 - r4)))

    print("KERNEL_OK")
</pallas_src>

<mosaic_0001>
module attributes {stable_mosaic.version = 11 : i64} {
  func.func @_mca_fused_kernel(%arg0: i32, %arg1: memref<1x64x256xf32, #tpu.memory_space<vmem>>, %arg2: memref<1x1x64xf32, #tpu.memory_space<vmem>>, %arg3: memref<64x64xf32, #tpu.memory_space<vmem>>, %arg4: memref<64x64xf32, #tpu.memory_space<vmem>>, %arg5: memref<1x64x256xf32, #tpu.memory_space<vmem>>) attributes {dimension_semantics = [#tpu.dimension_semantics<parallel>], iteration_bounds = array<i64: 2>, scalar_prefetch = 0 : i64, scratch_operands = 0 : i64, tpu.core_type = #tpu.core_type<tc>, window_params = [{transform_indices = @transform_0, window_bounds = array<i64: 1, 64, 256>}, {transform_indices = @transform_1, window_bounds = array<i64: 1, 1, 64>}, {pipeline_mode = #tpu.pipeline_mode<synchronous>, transform_indices = @transform_2, window_bounds = array<i64: 64, 64>}, {pipeline_mode = #tpu.pipeline_mode<synchronous>, transform_indices = @transform_3, window_bounds = array<i64: 64, 64>}, {transform_indices = @transform_4, window_bounds = array<i64: 1, 64, 256>}]} {
    %c0 = arith.constant 0 : index
    %c0_0 = arith.constant 0 : index
    %c0_1 = arith.constant 0 : index
    %0 = vector.load %arg1[%c0, %c0_0, %c0_1] : memref<1x64x256xf32, #tpu.memory_space<vmem>>, vector<1x64x256xf32>
    %cst = arith.constant dense<0.000000e+00> : vector<1x64xf32>
    %1 = vector.multi_reduction <add>, %0, %cst [2] : vector<1x64x256xf32> to vector<1x64xf32>
    %cst_2 = arith.constant 3.906250e-03 : f32
    %2 = vector.broadcast %cst_2 : f32 to vector<1x64xf32>
    %3 = arith.mulf %1, %2 : vector<1x64xf32>
    %c0_3 = arith.constant 0 : index
    %c0_4 = arith.constant 0 : index
    %c0_5 = arith.constant 0 : index
    %4 = vector.load %arg2[%c0_3, %c0_4, %c0_5] : memref<1x1x64xf32, #tpu.memory_space<vmem>>, vector<1x1x64xf32>
    %5 = vector.shape_cast %4 : vector<1x1x64xf32> to vector<1x64xf32>
    %c0_6 = arith.constant 0 : index
    %c0_7 = arith.constant 0 : index
    %6 = vector.load %arg3[%c0_6, %c0_7] : memref<64x64xf32, #tpu.memory_space<vmem>>, vector<64x64xf32>
    %cst_8 = arith.constant dense<0.000000e+00> : vector<1x64xf32>
    %7 = tpu.matmul %3, %6, %cst_8 {dimension_numbers = #tpu.dot_dimension_numbers<[1], [0], [0], [1], [0, 0, 1, 1], [], []>} : vector<1x64xf32>, vector<64x64xf32>, vector<1x64xf32> -> vector<1x64xf32>
    %c0_9 = arith.constant 0 : index
    %c0_10 = arith.constant 0 : index
    %8 = vector.load %arg4[%c0_9, %c0_10] : memref<64x64xf32, #tpu.memory_space<vmem>>, vector<64x64xf32>
    %cst_11 = arith.constant dense<0.000000e+00> : vector<1x64xf32>
    %9 = tpu.matmul %5, %8, %cst_11 {dimension_numbers = #tpu.dot_dimension_numbers<[1], [0], [0], [1], [0, 0, 1, 1], [], []>} : vector<1x64xf32>, vector<64x64xf32>, vector<1x64xf32> -> vector<1x64xf32>
    %10 = arith.mulf %7, %9 : vector<1x64xf32>
    %cst_12 = arith.constant 0.000000e+00 : f32
    %11 = vector.broadcast %cst_12 : f32 to vector<1x64xf32>
    %12 = arith.mulf %10, %11 : vector<1x64xf32>
    %cst_13 = arith.constant dense<0xFF800000> : vector<1xf32>
    %13 = vector.multi_reduction <maximumf>, %12, %cst_13 [1] : vector<1x64xf32> to vector<1xf32>
    %14 = vector.shape_cast %13 : vector<1xf32> to vector<1x1xf32>
    %15 = vector.broadcast %14 : vector<1x1xf32> to vector<1x64xf32>
    %16 = arith.subf %12, %15 : vector<1x64xf32>
    %17 = math.exp %16 : vector<1x64xf32>
    %cst_14 = arith.constant dense<0.000000e+00> : vector<1xf32>
    %18 = vector.multi_reduction <add>, %17, %cst_14 [1] : vector<1x64xf32> to vector<1xf32>
    %19 = vector.shape_cast %18 : vector<1xf32> to vector<1x1xf32>
    %20 = vector.broadcast %19 : vector<1x1xf32> to vector<1x64xf32>
    %21 = arith.divf %17, %20 : vector<1x64xf32>
    %22 = vector.shape_cast %21 : vector<1x64xf32> to vector<1x64x1xf32>
    %cst_15 = arith.constant 1.000000e+00 : f32
    %23 = vector.broadcast %cst_15 : f32 to vector<1x64x1xf32>
    %24 = arith.addf %22, %23 : vector<1x64x1xf32>
    %25 = vector.broadcast %24 : vector<1x64x1xf32> to vector<1x64x256xf32>
    %26 = arith.mulf %0, %25 : vector<1x64x256xf32>
    %c0_16 = arith.constant 0 : index
    %c0_17 = arith.constant 0 : index
    %c0_18 = arith.constant 0 : index
    %27 = vector.load %arg5[%c0_16, %c0_17, %c0_18] : memref<1x64x256xf32, #tpu.memory_space<vmem>>, vector<1x64x256xf32>
    tpu.vector_store %arg5[%c0_16, %c0_17, %c0_18], %26 {strides = array<i32>} : memref<1x64x256xf32, #tpu.memory_space<vmem>>, vector<1x64x256xf32>,
    return
  }
  func.func @transform_0(%arg0: i32) -> (i32, i32, i32) {
    %c0_i32 = arith.constant 0 : i32
    %c0_i32_0 = arith.constant 0 : i32
    %c0_i32_1 = arith.constant 0 : i32
    return %arg0, %c0_i32, %c0_i32_0 : i32, i32, i32
  }
  func.func @transform_1(%arg0: i32) -> (i32, i32, i32) {
    %c0_i32 = arith.constant 0 : i32
    %c0_i32_0 = arith.constant 0 : i32
    %c0_i32_1 = arith.constant 0 : i32
    return %arg0, %c0_i32, %c0_i32_0 : i32, i32, i32
  }
  func.func @transform_2(%arg0: i32) -> (i32, i32) {
    %c0_i32 = arith.constant 0 : i32
    %c0_i32_0 = arith.constant 0 : i32
    %c0_i32_1 = arith.constant 0 : i32
    return %c0_i32, %c0_i32_0 : i32, i32
  }
  func.func @transform_3(%arg0: i32) -> (i32, i32) {
    %c0_i32 = arith.constant 0 : i32
    %c0_i32_0 = arith.constant 0 : i32
    %c0_i32_1 = arith.constant 0 : i32
    return %c0_i32, %c0_i32_0 : i32, i32
  }
  func.func @transform_4(%arg0: i32) -> (i32, i32, i32) {
    %c0_i32 = arith.constant 0 : i32
    %c0_i32_0 = arith.constant 0 : i32
    %c0_i32_1 = arith.constant 0 : i32
    return %arg0, %c0_i32, %c0_i32_0 : i32, i32, i32
  }
}

</mosaic_0001>

<llo_original>
// kernel: tpu_custom_call.1
$region0: #{tpu_custom_call.1}
  #allocation0 [shape = 'u32[]', space=smem, size = 0x4, offset = 0x4, fixed_abs, tag = 'smem constant byte address 0x4 - core index']
  #allocation1 [shape = 'u32[144,128]{1,0:T(1,128)}', space=vmem, size = 0x12000, scoped, tag = 'internal scratch']
  %s0 = inlined_call_operand.hbm [shape: f32[2,64,256], index: 0, kind: input, shape index: {}]
  %s1 = inlined_call_operand.hbm [shape: f32[2,1,64], index: 1, kind: input, shape index: {}]
  %s2 = inlined_call_operand.hbm [shape: f32[64,64], index: 2, kind: input, shape index: {}]
  %s3 = inlined_call_operand.hbm [shape: f32[64,64], index: 3, kind: input, shape index: {}]
  %s4 = inlined_call_operand.hbm [shape: f32[2,64,256], index: 4, kind: output, shape index: {}]
  %s5 = sld [smem:[#allocation0]]
  $region65: #{tpu_custom_call.1} parent=0
    _
  %s7 = ssub.s32 1, %s5
  %s8 = scalar_select 0, %s7, %s5
  $region1: #{tpu_custom_call.1} parent=0
    #allocation2 [shape = 'u8[131072]{0}', space=vmem, size = 0x20000, scoped, tag = 'input window, operand 0']
    #allocation3 [shape = 's32[2]{0}', space=sflag, size = 0x8, scoped, tag = 'scoped memory for tpu_custom_call.1']
    #allocation4 [shape = 's32[2]{0}', space=sflag, size = 0x8, scoped, tag = 'scoped memory for tpu_custom_call.1']
    #allocation5 [shape = 'u8[1024]{0}', space=vmem, size = 0x400, scoped, tag = 'input window, operand 1']
    #allocation6 [shape = 's32[2]{0}', space=sflag, size = 0x8, scoped, tag = 'scoped memory for tpu_custom_call.1']
    #allocation7 [shape = 'u8[32768]{0}', space=vmem, size = 0x8000, scoped, tag = 'input window, operand 2, single buffered']
    #allocation8 [shape = 'u8[32768]{0}', space=vmem, size = 0x8000, scoped, tag = 'input window, operand 3, single buffered']
    #allocation9 [shape = 's32[1]{0}', space=sflag, size = 0x4, scoped, tag = 'scoped memory for tpu_custom_call.1']
    #allocation10 [shape = 'u8[131072]{0}', space=vmem, size = 0x20000, scoped, tag = 'output window, operand 0']
    %9 = vsyncpa [#allocation3], 0
    %s10 = scalar_lea.sflag [#allocation3], 1
    %11 = vsyncpa %s10, 0
    %12 = vsyncpa [#allocation6], 0
    %s13 = scalar_lea.sflag [#allocation6], 1
    %14 = vsyncpa %s13, 0
    %15 = vsyncpa [#allocation9], 0
    %16 = vsyncpa [#allocation4], 0
    %s17 = scalar_lea.sflag [#allocation4], 1
    %18 = vsyncpa %s17, 0
    loop: start=0, step=1, limit=4
    $region2: #{tpu_custom_call.1} parent=1 // loop_pre_header
      _
    $region3: #{tpu_custom_call.1} parent=1 // loop_header
      %s20 = sphi 0, %s24
      %p21 = scmp.ge.s32.totalorder %s20, 4
      %s30 = sphi 0, %s32
      %s33 = sphi 0, %s30
      %s34 = sphi 0, %s33
      %s50 = sphi 0, %s34
      %s56 = sphi 0, %s58
      %s59 = sphi 0, %s56
      %s60 = sphi 0, %s59
      %s76 = sphi 0, %s60
      %s80 = sphi 0, %s80
      %s82 = sphi 0, %s80
      %s83 = sphi 0, %s82
      %s97 = sphi 0, %s83
      %s101 = sphi 0, %s101
      %s103 = sphi 0, %s101
      %s104 = sphi 0, %s103
      %s118 = sphi 0, %s104
      %s124 = sphi 0, %s126
      %s127 = sphi 0, %s124
      %s128 = sphi 0, %s127
      %s144 = sphi 0, %s128
    $region4: #{tpu_custom_call.1} parent=1 // loop_header_branch
      %23 = sbr.rel (%p21) target = $region8
    $region5: #{tpu_custom_call.1} parent=1 // loop_body
      %s25 = ssub.s32 %s20, 1
      %s26 = ssub.s32 %s20, 2
      %s27 = sadd.s32 %s20, 1
      %s28 = ssub.s32 %s20, %s27
      %p29 = scmp.eq.s32.totalorder %s28, 0
      %s31 = sadd.s32 %s30, 1
      %s32 = scalar_select %p29, %s30, %s31
      %p35 = pneg %p29
      %p36 = scmp.eq.s32.totalorder %s20, 1
      %p37 = por %p35, %p36
      %p38 = scmp.ne.s32.totalorder %s30, %s33
      %p39 = scmp.eq.s32.totalorder %s20, 0
      %p40 = por %p38, %p39
      %p41 = scmp.ne.s32.totalorder %s30, %s33
      %p42 = scmp.eq.s32.totalorder %s25, 1
      %p43 = por %p41, %p42
      %p44 = scmp.ne.s32.totalorder %s33, %s34
      %p45 = scmp.eq.s32.totalorder %s25, 0
      %p46 = por %p44, %p45
      %p47 = scmp.ne.s32.totalorder %s33, %s34
      %p48 = scmp.eq.s32.totalorder %s26, 1
      %p49 = por %p47, %p48
      %p51 = scmp.ne.s32.totalorder %s34, %s50
      %p52 = scmp.eq.s32.totalorder %s26, 0
      %p53 = por %p51, %p52
      %s54 = ssub.s32 %s20, %s27
      %p55 = scmp.eq.s32.totalorder %s54, 0
      %s57 = sadd.s32 %s56, 1
      %s58 = scalar_select %p55, %s56, %s57
      %p61 = pneg %p55
      %p62 = scmp.eq.s32.totalorder %s20, 1
      %p63 = por %p61, %p62
      %p64 = scmp.ne.s32.totalorder %s56, %s59
      %p65 = scmp.eq.s32.totalorder %s20, 0
      %p66 = por %p64, %p65
      %p67 = scmp.ne.s32.totalorder %s56, %s59
      %p68 = scmp.eq.s32.totalorder %s25, 1
      %p69 = por %p67, %p68
      %p70 = scmp.ne.s32.totalorder %s59, %s60
      %p71 = scmp.eq.s32.totalorder %s25, 0
      %p72 = por %p70, %p71
      %p73 = scmp.ne.s32.totalorder %s59, %s60
      %p74 = scmp.eq.s32.totalorder %s26, 1
      %p75 = por %p73, %p74
      %p77 = scmp.ne.s32.totalorder %s60, %s76
      %p78 = scmp.eq.s32.totalorder %s26, 0
      %p79 = por %p77, %p78
      %s81 = sadd.s32 %s80, 1
      %p84 = scmp.eq.s32.totalorder %s20, 1
      %p85 = scmp.ne.s32.totalorder %s80, %s82
      %p86 = scmp.eq.s32.totalorder %s20, 0
      %p87 = por %p85, %p86
      %p88 = scmp.ne.s32.totalorder %s80, %s82
      %p89 = scmp.eq.s32.totalorder %s25, 1
      %p90 = por %p88, %p89
      %p91 = scmp.ne.s32.totalorder %s82, %s83
      %p92 = scmp.eq.s32.totalorder %s25, 0
      %p93 = por %p91, %p92
      %p94 = scmp.ne.s32.totalorder %s82, %s83
      %p95 = scmp.eq.s32.totalorder %s26, 1
      %p96 = por %p94, %p95
      %p98 = scmp.ne.s32.totalorder %s83, %s97
      %p99 = scmp.eq.s32.totalorder %s26, 0
      %p100 = por %p98, %p99
      %s102 = sadd.s32 %s101, 1
      %p105 = scmp.eq.s32.totalorder %s20, 1
      %p106 = scmp.ne.s32.totalorder %s101, %s103
      %p107 = scmp.eq.s32.totalorder %s20, 0
      %p108 = por %p106, %p107
      %p109 = scmp.ne.s32.totalorder %s101, %s103
      %p110 = scmp.eq.s32.totalorder %s25, 1
      %p111 = por %p109, %p110
      %p112 = scmp.ne.s32.totalorder %s103, %s104
      %p113 = scmp.eq.s32.totalorder %s25, 0
      %p114 = por %p112, %p113
      %p115 = scmp.ne.s32.totalorder %s103, %s104
      %p116 = scmp.eq.s32.totalorder %s26, 1
      %p117 = por %p115, %p116
      %p119 = scmp.ne.s32.totalorder %s104, %s118
      %p120 = scmp.eq.s32.totalorder %s26, 0
      %p121 = por %p119, %p120
      %s122 = ssub.s32 %s20, %s27
      %p123 = scmp.eq.s32.totalorder %s122, 0
      %s125 = sadd.s32 %s124, 1
      %s126 = scalar_select %p123, %s124, %s125
      %p129 = pneg %p123
      %p130 = scmp.eq.s32.totalorder %s20, 1
      %p131 = por %p129, %p130
      %p132 = scmp.ne.s32.totalorder %s124, %s127
      %p133 = scmp.eq.s32.totalorder %s20, 0
      %p134 = por %p132, %p133
      %p135 = scmp.ne.s32.totalorder %s124, %s127
      %p136 = scmp.eq.s32.totalorder %s25, 1
      %p137 = por %p135, %p136
      %p138 = scmp.ne.s32.totalorder %s127, %s128
      %p139 = scmp.eq.s32.totalorder %s25, 0
      %p140 = por %p138, %p139
      %p141 = scmp.ne.s32.totalorder %s127, %s128
      %p142 = scmp.eq.s32.totalorder %s26, 1
      %p143 = por %p141, %p142
      %p145 = scmp.ne.s32.totalorder %s128, %s144
      %p146 = scmp.eq.s32.totalorder %s26, 0
      %p147 = por %p145, %p146
      %p148 = scmp.le.s32.totalorder 1, %s20
      %p149 = scmp.lt.s32.totalorder %s20, 3
      %p150 = pnand %p148, %p149
      %p151 = pneg %p150
      // Predicated region
      $region9: #{tpu_custom_call.1} parent=5 // pred_check
        _
      $region10: #{tpu_custom_call.1} parent=5 // pred_check_branch
        %153 = sbr.rel (%p150) target = $region12
      $region11: #{tpu_custom_call.1} parent=5 // pred_region
        %s154 = ssub.s32 %s20, 1
        // Predicated region
        $region13: #{tpu_custom_call.1} parent=11 // pred_check
          %p155 = pneg %p93
        $region14: #{tpu_custom_call.1} parent=11 // pred_check_branch
          %157 = sbr.rel (%p155) target = $region16
        $region15: #{tpu_custom_call.1} parent=11 // pred_region
          %s159 = ssub.s32 1024, 1024
          %160 = vsyncadd [#allocation6], %s159
          %s161 = sshll.u32 [#allocation7], 4
          %s162 = int_to_ptr.vmem [resolvable:$true] %s161
          %167 = dma.hbm_to_vmem [thread:$0]  %s2, 1024, %s162, [#allocation6], 128, 128, 8
        $region16: #{tpu_custom_call.1} parent=11 // pred_fallthru
          _
        // Predicated region
        $region17: #{tpu_custom_call.1} parent=11 // pred_check
          %p168 = pneg %p114
        $region18: #{tpu_custom_call.1} parent=11 // pred_check_branch
          %170 = sbr.rel (%p168) target = $region20
        $region19: #{tpu_custom_call.1} parent=11 // pred_region
          %s172 = ssub.s32 1024, 1024
          %173 = vsyncadd [#allocation9], %s172
          %s174 = sshll.u32 [#allocation8], 4
          %s175 = int_to_ptr.vmem [resolvable:$true] %s174
          %180 = dma.hbm_to_vmem [thread:$0]  %s3, 1024, %s175, [#allocation9], 128, 128, 8
        $region20: #{tpu_custom_call.1} parent=11 // pred_fallthru
          _
      $region12: #{tpu_custom_call.1} parent=5 // pred_fallthru
        _
      %p181 = scmp.lt.s32.totalorder %s20, 2
      // Predicated region
      $region21: #{tpu_custom_call.1} parent=5 // pred_check
        %p182 = pneg %p181
      $region22: #{tpu_custom_call.1} parent=5 // pred_check_branch
        %184 = sbr.rel (%p182) target = $region24
      $region23: #{tpu_custom_call.1} parent=5 // pred_region
        // Predicated region
        $region25: #{tpu_custom_call.1} parent=23 // pred_check
          %p185 = pneg %p40
        $region26: #{tpu_custom_call.1} parent=23 // pred_check_branch
          %187 = sbr.rel (%p185) target = $region28
        $region27: #{tpu_custom_call.1} parent=23 // pred_region
          %s188 = sand.u32 %s30, 1
          %s189 = scalar_lea.sflag [#allocation3], %s188
          %s190 = sand.u32 %s30, 1
          %s191 = smul.addr %s190, 128
          %s192 = scalar_lea.vmem [#allocation2], %s191
          %s194 = ssub.s32 2048, 2048
          %195 = vsyncadd %s189, %s194
          %s196 = smul.addr %s20, 16
          %s197 = smul.addr %s196, 128
          %s198 = scalar_lea.hbm %s0, %s197
          %s199 = sshll.u32 %s192, 4
          %s200 = int_to_ptr.vmem [resolvable:$true] %s199
          %205 = dma.hbm_to_vmem [thread:$0]  %s198, 2048, %s200, %s189, 256, 256, 16
        $region28: #{tpu_custom_call.1} parent=23 // pred_fallthru
          _
        // Predicated region
        $region29: #{tpu_custom_call.1} parent=23 // pred_check
          %p206 = pneg %p66
        $region30: #{tpu_custom_call.1} parent=23 // pred_check_branch
          %208 = sbr.rel (%p206) target = $region32
        $region31: #{tpu_custom_call.1} parent=23 // pred_region
          %s209 = sand.u32 %s20, 1
          %s210 = scalar_lea.sflag [#allocation6], %s209
          %s211 = sand.u32 %s56, 1
          %s212 = scalar_lea.vmem [#allocation5], %s211
          %s214 = ssub.s32 16, 16
          %215 = vsyncadd %s210, %s214
          %s216 = smul.addr %s20, 16
          %s217 = scalar_lea.hbm %s1, %s216
          %s219 = sshll.u32 %s212, 4
          %s220 = int_to_ptr.vmem [resolvable:$true] %s219
          %222 = dma.hbm_to_vmem [thread:$0]  %s217, 16, %s220, %s210
        $region32: #{tpu_custom_call.1} parent=23 // pred_fallthru
          _
      $region24: #{tpu_custom_call.1} parent=5 // pred_fallthru
        _
      %p223 = scmp.le.s32.totalorder 1, %s20
      %p224 = scmp.lt.s32.totalorder %s20, 3
      %p225 = pnand %p223, %p224
      %p226 = pneg %p225
      // Predicated region
      $region33: #{tpu_custom_call.1} parent=5 // pred_check
        _
      $region34: #{tpu_custom_call.1} parent=5 // pred_check_branch
        %228 = sbr.rel (%p225) target = $region36
      $region35: #{tpu_custom_call.1} parent=5 // pred_region
        %s229 = ssub.s32 %s20, 1
        %s230 = sand.u32 %s33, 1
        %s231 = scalar_lea.sflag [#allocation3], %s230
        %s232 = sand.u32 %s33, 1
        %s233 = smul.addr %s232, 128
        %s234 = scalar_lea.vmem [#allocation2], %s233
        // Predicated region
        $region37: #{tpu_custom_call.1} parent=35 // pred_check
          %p235 = pneg %p46
        $region38: #{tpu_custom_call.1} parent=35 // pred_check_branch
          %237 = sbr.rel (%p235) target = $region40
        $region39: #{tpu_custom_call.1} parent=35 // pred_region
          %238 = dma.done %s231, 2048
        $region40: #{tpu_custom_call.1} parent=35 // pred_fallthru
          _
        %s239 = sand.u32 %s25, 1
        %s240 = scalar_lea.sflag [#allocation6], %s239
        %s241 = sand.u32 %s59, 1
        %s242 = scalar_lea.vmem [#allocation5], %s241
        // Predicated region
        $region41: #{tpu_custom_call.1} parent=35 // pred_check
          %p243 = pneg %p72
        $region42: #{tpu_custom_call.1} parent=35 // pred_check_branch
          %245 = sbr.rel (%p243) target = $region44
        $region43: #{tpu_custom_call.1} parent=35 // pred_region
          %246 = dma.done %s240, 16
        $region44: #{tpu_custom_call.1} parent=35 // pred_fallthru
          _
        // Predicated region
        $region45: #{tpu_custom_call.1} parent=35 // pred_check
          %p247 = pneg %p93
        $region46: #{tpu_custom_call.1} parent=35 // pred_check_branch
          %249 = sbr.rel (%p247) target = $region48
        $region47: #{tpu_custom_call.1} parent=35 // pred_region
          %250 = dma.done [#allocation6], 1024
        $region48: #{tpu_custom_call.1} parent=35 // pred_fallthru
          _
        // Predicated region
        $region49: #{tpu_custom_call.1} parent=35 // pred_check
          %p251 = pneg %p114
        $region50: #{tpu_custom_call.1} parent=35 // pred_check_branch
          %253 = sbr.rel (%p251) target = $region52
        $region51: #{tpu_custom_call.1} parent=35 // pred_region
          %254 = dma.done [#allocation9], 1024
        $region52: #{tpu_custom_call.1} parent=35 // pred_fallthru
          _
        %s255 = sand.u32 %s33, 1
        %s256 = scalar_lea.sflag [#allocation3], %s255
        %s257 = sand.u32 %s33, 1
        %s258 = smul.addr %s257, 128
        %s259 = scalar_lea.vmem [#allocation2], %s258
        %p260 = pneg %p46
        %p261 = pneg %p43
        %s262 = sand.u32 %s25, 1
        %s263 = scalar_lea.sflag [#allocation6], %s262
        %s264 = sand.u32 %s59, 1
        %s265 = scalar_lea.vmem [#allocation5], %s264
        %p266 = pneg %p72
        %p267 = pneg %p69
        %p268 = pneg %p93
        %p269 = pneg %p90
        %p270 = pneg %p114
        %p271 = pneg %p111
        %p272 = pneg %p140
        %p273 = pneg %p137
        %s274 = sand.u32 %s127, 1
        %s275 = scalar_lea.sflag [#allocation4], %s274
        %s276 = sand.u32 %s127, 1
        %s277 = smul.addr %s276, 128
        %s278 = scalar_lea.vmem [#allocation10], %s277
        %v279 = vld [vmem:[%s234] sm:$0xff]
        %v280 = vld [vmem:[%s234 + $0x8] sm:$0xff]
        %v281 = vld [vmem:[%s234 + $0x10] sm:$0xff]
        %v282 = vld [vmem:[%s234 + $0x18] sm:$0xff]
        %v283 = vld [vmem:[%s234 + $0x20] sm:$0xff]
        %v284 = vld [vmem:[%s234 + $0x28] sm:$0xff]
        %v285 = vld [vmem:[%s234 + $0x30] sm:$0xff]
        %v286 = vld [vmem:[%s234 + $0x38] sm:$0xff]
        %v287 = vld [vmem:[%s234 + $0x40] sm:$0xff]
        %v288 = vld [vmem:[%s234 + $0x48] sm:$0xff]
        %v289 = vld [vmem:[%s234 + $0x50] sm:$0xff]
        %v290 = vld [vmem:[%s234 + $0x58] sm:$0xff]
        %v291 = vld [vmem:[%s234 + $0x60] sm:$0xff]
        %v292 = vld [vmem:[%s234 + $0x68] sm:$0xff]
        %v293 = vld [vmem:[%s234 + $0x70] sm:$0xff]
        %v294 = vld [vmem:[%s234 + $0x78] sm:$0xff]
        %v295 = vadd.f32 %v279, %v280
        %296 = vadd.xlane.f32.xlu0 %v295
        %v297 = vpop.xlane.xlu0 %296
        %v298 = vadd.f32 %v281, %v282
        %299 = vadd.xlane.f32.xlu0 %v298
        %v300 = vpop.xlane.xlu0 %299
        %v301 = vadd.f32 %v283, %v284
        %302 = vadd.xlane.f32.xlu0 %v301
        %v303 = vpop.xlane.xlu0 %302
        %v304 = vadd.f32 %v285, %v286
        %305 = vadd.xlane.f32.xlu0 %v304
        %v306 = vpop.xlane.xlu0 %305
        %v307 = vadd.f32 %v287, %v288
        %308 = vadd.xlane.f32.xlu0 %v307
        %v309 = vpop.xlane.xlu0 %308
        %v310 = vadd.f32 %v289, %v290
        %311 = vadd.xlane.f32.xlu0 %v310
        %v312 = vpop.xlane.xlu0 %311
        %v313 = vadd.f32 %v291, %v292
        %314 = vadd.xlane.f32.xlu0 %v313
        %v315 = vpop.xlane.xlu0 %314
        %v316 = vadd.f32 %v293, %v294
        %317 = vadd.xlane.f32.xlu0 %v316
        %v318 = vpop.xlane.xlu0 %317
        %v319 = vmul.f32 %v297, 0.00390625
        %v320 = vmul.f32 %v300, 0.00390625
        %v321 = vmul.f32 %v303, 0.00390625
        %v322 = vmul.f32 %v306, 0.00390625
        %v323 = vmul.f32 %v309, 0.00390625
        %v324 = vmul.f32 %v312, 0.00390625
        %v325 = vmul.f32 %v315, 0.00390625
        %v326 = vmul.f32 %v318, 0.00390625
        %v327 = vld [vmem:[%s242] sm:$0x1]
        %v328 = vld [vmem:[#allocation7] sm:$0xff]
        %v329 = vld [vmem:[#allocation7 + $0x8] sm:$0xff]
        %v330 = vld [vmem:[#allocation7 + $0x10] sm:$0xff]
        %v331 = vld [vmem:[#allocation7 + $0x18] sm:$0xff]
        %v332 = vld [vmem:[#allocation7 + $0x20] sm:$0xff]
        %v333 = vld [vmem:[#allocation7 + $0x28] sm:$0xff]
        %v334 = vld [vmem:[#allocation7 + $0x30] sm:$0xff]
        %v335 = vld [vmem:[#allocation7 + $0x38] sm:$0xff]
        %v344 = vlaneseq
        %v345 = vand.u32 %v344, 127
        %v346 = vlaneseq
        %v347 = vshrl.u32 %v346, 7
        %v348 = vsub.s32 %v345, %v347
        %v349 = vrot.slane %v319, %v348
        %v350 = vadd.s32 %v345, 4294967288
        %v351 = vlaneseq
        %v352 = vshrl.u32 %v351, 7
        %v353 = vsub.s32 %v350, %v352
        %v354 = vrot.slane %v320, %v353
        %vm355 = vcmask 130112
        %v356 = vsel %vm355, %v354, %v349
        %v357 = vadd.s32 %v345, 4294967280
        %v358 = vlaneseq
        %v359 = vshrl.u32 %v358, 7
        %v360 = vsub.s32 %v357, %v359
        %v361 = vrot.slane %v321, %v360
        %vm362 = vcmask 195712
        %v363 = vsel %vm362, %v361, %v356
        %v364 = vadd.s32 %v345, 4294967272
        %v365 = vlaneseq
        %v366 = vshrl.u32 %v365, 7
        %v367 = vsub.s32 %v364, %v366
        %v368 = vrot.slane %v322, %v367
        %vm369 = vcmask 261312
        %v370 = vsel %vm369, %v368, %v363
        %v371 = vadd.s32 %v345, 4294967264
        %v372 = vlaneseq
        %v373 = vshrl.u32 %v372, 7
        %v374 = vsub.s32 %v371, %v373
        %v375 = vrot.slane %v323, %v374
        %vm376 = vcmask 326912
        %v377 = vsel %vm376, %v375, %v370
        %v378 = vadd.s32 %v345, 4294967256
        %v379 = vlaneseq
        %v380 = vshrl.u32 %v379, 7
        %v381 = vsub.s32 %v378, %v380
        %v382 = vrot.slane %v324, %v381
        %vm383 = vcmask 392512
        %v384 = vsel %vm383, %v382, %v377
        %v385 = vadd.s32 %v345, 4294967248
        %v386 = vlaneseq
        %v387 = vshrl.u32 %v386, 7
        %v388 = vsub.s32 %v385, %v387
        %v389 = vrot.slane %v325, %v388
        %vm390 = vcmask 458112
        %v391 = vsel %vm390, %v389, %v384
        %v392 = vadd.s32 %v345, 4294967240
        %v393 = vlaneseq
        %v394 = vshrl.u32 %v393, 7
        %v395 = vsub.s32 %v392, %v394
        %v396 = vrot.slane %v326, %v395
        %vm397 = vcmask 523712
        %v398 = vsel %vm397, %v396, %v391
        %vm399 = vcmask 523264
        %v400 = vsel %vm399, %v398, 0
        %402 = vmatprep.subr.mxu0 0.0
        %403 = vmatpush1.msra.mxu0 0.0
        %404 = vmatprep.subr.mxu0 0.0
        %405 = vmatpush1.msra.mxu0 0.0
        %406 = vmatprep.subr.mxu0 0.0
        %407 = vmatpush1.msra.mxu0 0.0
        %408 = vmatprep.subr.mxu0 0.0
        %409 = vmatpush1.msra.mxu0 0.0
        %410 = vmatprep.subr.mxu0 0.0
        %411 = vmatpush1.msra.mxu0 0.0
        %412 = vmatprep.subr.mxu0 0.0
        %413 = vmatpush1.msra.mxu0 0.0
        %414 = vmatprep.subr.mxu0 0.0
        %415 = vmatpush1.msra.mxu0 0.0
        %416 = vmatprep.subr.mxu0 0.0
        %417 = vmatpush1.msra.mxu0 0.0
        %418 = vmatprep.subr.mxu0 0.0
        %419 = vmatpush1.msra.mxu0 %v335
        %420 = vmatprep.subr.mxu0 0.0
        %421 = vmatpush1.msra.mxu0 %v334
        %422 = vmatprep.subr.mxu0 0.0
        %423 = vmatpush1.msra.mxu0 %v333
        %424 = vmatprep.subr.mxu0 0.0
        %425 = vmatpush1.msra.mxu0 %v332
        %426 = vmatprep.subr.mxu0 0.0
        %427 = vmatpush1.msra.mxu0 %v331
        %428 = vmatprep.subr.mxu0 0.0
        %429 = vmatpush1.msra.mxu0 %v330
        %430 = vmatprep.subr.mxu0 0.0
        %431 = vmatpush1.msra.mxu0 %v329
        %432 = vmatprep.subr.mxu0 0.0
        %433 = vmatpush1.msra.mxu0 %v328
        %434 = vmatprep.subr.mxu0 0.0
        %435 = vmatpush2.msra.mxu0 0.0
        %436 = vmatprep.subr.mxu0 0.0
        %437 = vmatpush2.msra.mxu0 0.0
        %438 = vmatprep.subr.mxu0 0.0
        %439 = vmatpush2.msra.mxu0 0.0
        %440 = vmatprep.subr.mxu0 0.0
        %441 = vmatpush2.msra.mxu0 0.0
        %442 = vmatprep.subr.mxu0 0.0
        %443 = vmatpush2.msra.mxu0 0.0
        %444 = vmatprep.subr.mxu0 0.0
        %445 = vmatpush2.msra.mxu0 0.0
        %446 = vmatprep.subr.mxu0 0.0
        %447 = vmatpush2.msra.mxu0 0.0
        %448 = vmatprep.subr.mxu0 0.0
        %449 = vmatpush2.msra.mxu0 0.0
        %450 = vmatprep.subr.mxu0 0.0
        %451 = vmatpush2.msra.mxu0 0.0
        %452 = vmatprep.subr.mxu0 0.0
        %453 = vmatpush2.msra.mxu0 0.0
        %454 = vmatprep.subr.mxu0 0.0
        %455 = vmatpush2.msra.mxu0 0.0
        %456 = vmatprep.subr.mxu0 0.0
        %457 = vmatpush2.msra.mxu0 0.0
        %458 = vmatprep.subr.mxu0 0.0
        %459 = vmatpush2.msra.mxu0 0.0
        %460 = vmatprep.subr.mxu0 0.0
        %461 = vmatpush2.msra.mxu0 0.0
        %462 = vmatprep.subr.mxu0 0.0
        %463 = vmatpush2.msra.mxu0 0.0
        %464 = vmatprep.subr.mxu0 0.0
        %465 = vmatpush2.msra.mxu0 0.0
        %466 = vmatprep.mubr.f32.mxu0 0.0
        %467 = vmatmul.mubr.f32.gmra.mxu0 %v400
        %v468 = vpop.f32.mrf.mxu0
        %v469 = vadd.f32 0.0, %v468
        %v470 = vpop.f32.mrf.mxu0
        %471 = vdwg.mxu0
        %v472 = vld [vmem:[#allocation8] sm:$0xff]
        %v473 = vld [vmem:[#allocation8 + $0x8] sm:$0xff]
        %v474 = vld [vmem:[#allocation8 + $0x10] sm:$0xff]
        %v475 = vld [vmem:[#allocation8 + $0x18] sm:$0xff]
        %v476 = vld [vmem:[#allocation8 + $0x20] sm:$0xff]
        %v477 = vld [vmem:[#allocation8 + $0x28] sm:$0xff]
        %v478 = vld [vmem:[#allocation8 + $0x30] sm:$0xff]
        %v479 = vld [vmem:[#allocation8 + $0x38] sm:$0xff]
        %v481 = vsel %vm399, %v327, 0
        %483 = vmatprep.subr.mxu0 0.0
        %484 = vmatpush1.msra.mxu0 0.0
        %485 = vmatprep.subr.mxu0 0.0
        %486 = vmatpush1.msra.mxu0 0.0
        %487 = vmatprep.subr.mxu0 0.0
        %488 = vmatpush1.msra.mxu0 0.0
        %489 = vmatprep.subr.mxu0 0.0
        %490 = vmatpush1.msra.mxu0 0.0
        %491 = vmatprep.subr.mxu0 0.0
        %492 = vmatpush1.msra.mxu0 0.0
        %493 = vmatprep.subr.mxu0 0.0
        %494 = vmatpush1.msra.mxu0 0.0
        %495 = vmatprep.subr.mxu0 0.0
        %496 = vmatpush1.msra.mxu0 0.0
        %497 = vmatprep.subr.mxu0 0.0
        %498 = vmatpush1.msra.mxu0 0.0
        %499 = vmatprep.subr.mxu0 0.0
        %500 = vmatpush1.msra.mxu0 %v479
        %501 = vmatprep.subr.mxu0 0.0
        %502 = vmatpush1.msra.mxu0 %v478
        %503 = vmatprep.subr.mxu0 0.0
        %504 = vmatpush1.msra.mxu0 %v477
        %505 = vmatprep.subr.mxu0 0.0
        %506 = vmatpush1.msra.mxu0 %v476
        %507 = vmatprep.subr.mxu0 0.0
        %508 = vmatpush1.msra.mxu0 %v475
        %509 = vmatprep.subr.mxu0 0.0
        %510 = vmatpush1.msra.mxu0 %v474
        %511 = vmatprep.subr.mxu0 0.0
        %512 = vmatpush1.msra.mxu0 %v473
        %513 = vmatprep.subr.mxu0 0.0
        %514 = vmatpush1.msra.mxu0 %v472
        %515 = vmatprep.subr.mxu0 0.0
        %516 = vmatpush2.msra.mxu0 0.0
        %517 = vmatprep.subr.mxu0 0.0
        %518 = vmatpush2.msra.mxu0 0.0
        %519 = vmatprep.subr.mxu0 0.0
        %520 = vmatpush2.msra.mxu0 0.0
        %521 = vmatprep.subr.mxu0 0.0
        %522 = vmatpush2.msra.mxu0 0.0
        %523 = vmatprep.subr.mxu0 0.0
        %524 = vmatpush2.msra.mxu0 0.0
        %525 = vmatprep.subr.mxu0 0.0
        %526 = vmatpush2.msra.mxu0 0.0
        %527 = vmatprep.subr.mxu0 0.0
        %528 = vmatpush2.msra.mxu0 0.0
        %529 = vmatprep.subr.mxu0 0.0
        %530 = vmatpush2.msra.mxu0 0.0
        %531 = vmatprep.subr.mxu0 0.0
        %532 = vmatpush2.msra.mxu0 0.0
        %533 = vmatprep.subr.mxu0 0.0
        %534 = vmatpush2.msra.mxu0 0.0
        %535 = vmatprep.subr.mxu0 0.0
        %536 = vmatpush2.msra.mxu0 0.0
        %537 = vmatprep.subr.mxu0 0.0
        %538 = vmatpush2.msra.mxu0 0.0
        %539 = vmatprep.subr.mxu0 0.0
        %540 = vmatpush2.msra.mxu0 0.0
        %541 = vmatprep.subr.mxu0 0.0
        %542 = vmatpush2.msra.mxu0 0.0
        %543 = vmatprep.subr.mxu0 0.0
        %544 = vmatpush2.msra.mxu0 0.0
        %545 = vmatprep.subr.mxu0 0.0
        %546 = vmatpush2.msra.mxu0 0.0
        %547 = vmatprep.mubr.f32.mxu0 0.0
        %548 = vmatmul.mubr.f32.gmra.mxu0 %v481
        %v549 = vpop.f32.mrf.mxu0
        %v550 = vadd.f32 0.0, %v549
        %v551 = vpop.f32.mrf.mxu0
        %552 = vdwg.mxu0
        %v553 = vmul.f32 %v469, %v550
        %v554 = vmul.f32 %v553, 0.0
        %vm555 = vcmask 516096
        %v556 = vsel %vm555, %v554, -inf
        %557 = vmax.xlane.f32.xlu0 %v556
        %v558 = vpop.xlane.xlu0 %557
        %v559 = vsub.f32 %v554, %v558
        %v560 = vmul.f32 %v559, 1.442695
        %v561 = vpow.pop %v560
        %v562 = vsel %vm555, %v561, 0.0
        %563 = vadd.xlane.f32.xlu0 %v562
        %v564 = vpop.xlane.xlu0 %563
        %v565 = vrcp.pop %v564
        %v566 = vmul.f32 %v561, %v565
        %v567 = vlaneseq
        %v568 = vshrl.u32 %v567, 7
        %v569 = vsub.s32 0, %v568
        %v570 = vrot.slane %v566, %v569
        %572 = vbcast.lane.b32.xlu0 %v570, 256
        %v573 = vpop.permute.xlu0 %572
        %s575 = sor.u32 256, 8
        %576 = vbcast.lane.b32.xlu0 %v570, %s575
        %v577 = vpop.permute.xlu0 %576
        %s579 = sor.u32 256, 16
        %580 = vbcast.lane.b32.xlu0 %v570, %s579
        %v581 = vpop.permute.xlu0 %580
        %s583 = sor.u32 256, 24
        %584 = vbcast.lane.b32.xlu0 %v570, %s583
        %v585 = vpop.permute.xlu0 %584
        %s587 = sor.u32 256, 32
        %588 = vbcast.lane.b32.xlu0 %v570, %s587
        %v589 = vpop.permute.xlu0 %588
        %s591 = sor.u32 256, 40
        %592 = vbcast.lane.b32.xlu0 %v570, %s591
        %v593 = vpop.permute.xlu0 %592
        %s595 = sor.u32 256, 48
        %596 = vbcast.lane.b32.xlu0 %v570, %s595
        %v597 = vpop.permute.xlu0 %596
        %s599 = sor.u32 256, 56
        %600 = vbcast.lane.b32.xlu0 %v570, %s599
        %v601 = vpop.permute.xlu0 %600
        %v602 = vadd.f32 %v573, 1.0
        %v603 = vadd.f32 %v577, 1.0
        %v604 = vadd.f32 %v581, 1.0
        %v605 = vadd.f32 %v585, 1.0
        %v606 = vadd.f32 %v589, 1.0
        %v607 = vadd.f32 %v593, 1.0
        %v608 = vadd.f32 %v597, 1.0
        %v609 = vadd.f32 %v601, 1.0
        %v610 = vmul.f32 %v279, %v602
        %v611 = vmul.f32 %v280, %v602
        %v612 = vmul.f32 %v281, %v603
        %v613 = vmul.f32 %v282, %v603
        %v614 = vmul.f32 %v283, %v604
        %v615 = vmul.f32 %v284, %v604
        %v616 = vmul.f32 %v285, %v605
        %v617 = vmul.f32 %v286, %v605
        %v618 = vmul.f32 %v287, %v606
        %v619 = vmul.f32 %v288, %v606
        %v620 = vmul.f32 %v289, %v607
        %v621 = vmul.f32 %v290, %v607
        %v622 = vmul.f32 %v291, %v608
        %v623 = vmul.f32 %v292, %v608
        %v624 = vmul.f32 %v293, %v609
        %v625 = vmul.f32 %v294, %v609
        %626 = vst [vmem:[%s278] sm:$0xff] %v610
        %627 = vst [vmem:[%s278 + $0x8] sm:$0xff] %v611
        %628 = vst [vmem:[%s278 + $0x10] sm:$0xff] %v612
        %629 = vst [vmem:[%s278 + $0x18] sm:$0xff] %v613
        %630 = vst [vmem:[%s278 + $0x20] sm:$0xff] %v614
        %631 = vst [vmem:[%s278 + $0x28] sm:$0xff] %v615
        %632 = vst [vmem:[%s278 + $0x30] sm:$0xff] %v616
        %633 = vst [vmem:[%s278 + $0x38] sm:$0xff] %v617
        %634 = vst [vmem:[%s278 + $0x40] sm:$0xff] %v618
        %635 = vst [vmem:[%s278 + $0x48] sm:$0xff] %v619
        %636 = vst [vmem:[%s278 + $0x50] sm:$0xff] %v620
        %637 = vst [vmem:[%s278 + $0x58] sm:$0xff] %v621
        %638 = vst [vmem:[%s278 + $0x60] sm:$0xff] %v622
        %639 = vst [vmem:[%s278 + $0x68] sm:$0xff] %v623
        %640 = vst [vmem:[%s278 + $0x70] sm:$0xff] %v624
        %641 = vst [vmem:[%s278 + $0x78] sm:$0xff] %v625
        %s642 = sand.u32 %s127, 1
        %s643 = scalar_lea.sflag [#allocation4], %s642
        %s644 = sand.u32 %s127, 1
        %s645 = smul.addr %s644, 128
        %s646 = scalar_lea.vmem [#allocation10], %s645
        // Predicated region
        $region53: #{tpu_custom_call.1} parent=35 // pred_check
          %p647 = pneg %p137
        $region54: #{tpu_custom_call.1} parent=35 // pred_check_branch
          %649 = sbr.rel (%p647) target = $region56
        $region55: #{tpu_custom_call.1} parent=35 // pred_region
          %s651 = ssub.s32 2048, 2048
          %652 = vsyncadd %s643, %s651
          %s653 = smul.addr %s25, 16
          %s654 = smul.addr %s653, 128
          %s655 = scalar_lea.hbm %s4, %s654
          %s656 = sshll.u32 %s646, 4
          %s657 = int_to_ptr.vmem [resolvable:$true] %s656
          %662 = dma.vmem_to_hbm [thread:$0]  %s657, 2048, %s655, %s643, 256, 256, 16
        $region56: #{tpu_custom_call.1} parent=35 // pred_fallthru
          _
      $region36: #{tpu_custom_call.1} parent=5 // pred_fallthru
        _
      %p663 = scmp.le.s32.totalorder 2, %s20
      // Predicated region
      $region57: #{tpu_custom_call.1} parent=5 // pred_check
        %p664 = pneg %p663
      $region58: #{tpu_custom_call.1} parent=5 // pred_check_branch
        %666 = sbr.rel (%p664) target = $region60
      $region59: #{tpu_custom_call.1} parent=5 // pred_region
        %s667 = ssub.s32 %s20, 2
        // Predicated region
        $region61: #{tpu_custom_call.1} parent=59 // pred_check
          %p668 = pneg %p143
        $region62: #{tpu_custom_call.1} parent=59 // pred_check_branch
          %670 = sbr.rel (%p668) target = $region64
        $region63: #{tpu_custom_call.1} parent=59 // pred_region
          %s671 = sand.u32 %s128, 1
          %s672 = scalar_lea.sflag [#allocation4], %s671
          %s673 = sand.u32 %s128, 1
          %s674 = smul.addr %s673, 128
          %s675 = scalar_lea.vmem [#allocation10], %s674
          %676 = dma.done %s672, 2048
        $region64: #{tpu_custom_call.1} parent=59 // pred_fallthru
          _
      $region60: #{tpu_custom_call.1} parent=5 // pred_fallthru
        _
    $region6: #{tpu_custom_call.1} parent=1 // loop_footer
      %s24 = sadd.s32 1, %s20
    $region7: #{tpu_custom_call.1} parent=1 // loop_footer_branch
      %19 = sbr.rel target = $region3
    $region8: #{tpu_custom_call.1} parent=1 // loop_exit
      _
    %677 = vsyncpa [#allocation3], 1
    %s678 = scalar_lea.sflag [#allocation3], 1
    %679 = vsyncpa %s678, 1
    %680 = vsyncpa [#allocation6], 1
    %s681 = scalar_lea.sflag [#allocation6], 1
    %682 = vsyncpa %s681, 1
    %683 = vsyncpa [#allocation9], 1
    %684 = vsyncpa [#allocation4], 1
    %s685 = scalar_lea.sflag [#allocation4], 1
    %686 = vsyncpa %s685, 1

</llo_original>
